<compile_context>
chip_gen: v6e
topology: v6e:2x2x1
jax: 0.10.0
libtpu: 0.0.40
codegen_flags: <defaults>
</compile_context>

<pallas_src>
import functools

import jax
import jax.numpy as jnp
from jax.experimental import pallas as pl
from jax.experimental.pallas import tpu as pltpu

LANE = 128      # vreg lane width
SUBLANE = 8     # vreg sublane count (f32)
MIN_SPLIT_TILE = 512   # don't split the batch across grid steps below this


def _cdiv(a, b):
    return -(-a // b)


def _round_up(n, m):
    return ((n + m - 1) // m) * m


# ---------------------------------------------------------------------------
# Kernel
# ---------------------------------------------------------------------------
def _fused_mlp_kernel(x_ref, *args, num_hidden):
    """Fused MLP forward for one batch tile.

    x_ref:  (TILE_B, in_dim)                     input tile (no lane padding)
    args:   w_0, b_0, ..., w_{H-1}, b_{H-1},     hidden layers (outputs padded
                                                 to 128 lanes; inputs padded
                                                 from layer 1 on)
            w_out_row (1, F_pad), b_out (1, 1),  final affine layer
            o_ref (1, 1, TILE_B)                 lane-dense output tile
    All intermediates live in VMEM / vregs; a single lane-dense store at end.
    """
    o_ref = args[-1]
    w_out_ref = args[-3]
    b_out_ref = args[-2]

    h = x_ref[...]
    for layer in range(num_hidden):
        w = args[2 * layer][...]
        b = args[2 * layer + 1][...]
        h = jnp.maximum(
            jnp.dot(h, w, preferred_element_type=jnp.float32) + b, 0.0
        )

    # Final Linear(F -> 1) + Sigmoid, computed lane-major:
    #   (1, F_pad) @ (TILE_B, F_pad)^T -> (1, TILE_B)
    # q@k^T-style contraction over the last dims; the result row is lane-dense
    # (unmasked vst, 128 useful sigmoid lanes per vreg) instead of a
    # (TILE_B, 1) column of masked 1-lane stores.
    logits = jax.lax.dot_general(
        w_out_ref[...], h,
        dimension_numbers=(((1,), (1,)), ((), ())),
        preferred_element_type=jnp.float32,
    ) + b_out_ref[...]                                  # (1, TILE_B)
    rating = jax.nn.sigmoid(logits)
    o_ref[...] = rating[None].astype(o_ref.dtype)       # (1, 1, TILE_B)


# ---------------------------------------------------------------------------
# Parameter preparation (done once, outside any per-call path)
# ---------------------------------------------------------------------------
def init_mlp_params(key, layers):
    """Mimics torch.nn.Linear default init: U(-1/sqrt(in), 1/sqrt(in)).

    Returns a list of (W_transposed (in, out), b (out,)) for the hidden stack,
    plus the affine_output layer (last hidden size -> 1) as the final entry.
    """
    params = []
    sizes = list(zip(layers[:-1], layers[1:])) + [(layers[-1], 1)]
    for in_size, out_size in sizes:
        key, kw, kb = jax.random.split(key, 3)
        bound = 1.0 / (in_size ** 0.5)
        w_t = jax.random.uniform(kw, (in_size, out_size), jnp.float32, -bound, bound)
        b = jax.random.uniform(kb, (out_size,), jnp.float32, -bound, bound)
        params.append((w_t, b))
    return params


def prepare_params(params):
    """Pad weights/biases for lane-dense in-kernel math.

    * First hidden layer keeps its true input dim (matches unpadded x — no
      extra per-row HBM traffic); its output dim is padded to 128 lanes.
    * Deeper layers pad both dims to 128 (their inputs are the previous
      layer's padded activations, which never leave VMEM).
    * Padding is numerically exact: padded input lanes hit zero weight rows,
      padded output lanes get zero bias and stay zero through ReLU.
    """
    *hidden, (w_last, b_last) = params
    hidden_padded = []
    for li, (w_t, b) in enumerate(hidden):
        in_s, out_s = w_t.shape
        in_p = in_s if li == 0 else _round_up(in_s, LANE)
        out_p = _round_up(out_s, LANE)
        w_p = jnp.zeros((in_p, out_p), jnp.float32).at[:in_s, :out_s].set(w_t)
        b_p = jnp.zeros((1, out_p), jnp.float32).at[0, :out_s].set(b)
        hidden_padded.append((w_p, b_p))
    # Final layer as a (1, F_pad) row for the in-kernel trans-B contraction.
    f_s = w_last.shape[0]
    f_p = _round_up(f_s, LANE) if hidden else f_s
    w_out_row = jnp.zeros((1, f_p), jnp.float32).at[0, :f_s].set(w_last[:, 0])
    b_out = jnp.reshape(b_last, (1, 1)).astype(jnp.float32)
    return hidden_padded, w_out_row, b_out


# ---------------------------------------------------------------------------
# Wrapper
# ---------------------------------------------------------------------------
def mlp_forward(x, prepared, *, tile_b_max=2048):
    """Replicates MLP.forward with a single fused pallas_call."""
    hidden_padded, w_out_row, b_out = prepared
    B, in_dim = x.shape

    # --- batch tile selection ------------------------------------------------
    b_ru = _round_up(B, SUBLANE)
    if b_ru <= tile_b_max:
        # Whole batch fits one tile; split into 2 parallel steps for v7x's two
        # TensorCores when each half is still a big (>=512-row) tile.
        if b_ru >= 2 * MIN_SPLIT_TILE:
            tile_b = _round_up(_cdiv(b_ru, 2), SUBLANE)
        else:
            tile_b = b_ru
    else:
        # Multiple steps anyway; balance tiles to minimize padded-row waste.
        n_steps = _cdiv(b_ru, tile_b_max)
        tile_b = _round_up(_cdiv(b_ru, n_steps), SUBLANE)
    num_tiles = _cdiv(b_ru, tile_b)
    b_pad = num_tiles * tile_b

    # Minimal padding: only the remainder batch rows, never the feature lanes.
    x = x.astype(jnp.float32)
    if b_pad != B:
        x = jnp.pad(x, ((0, b_pad - B), (0, 0)))

    flat_params = []
    in_specs = [pl.BlockSpec((tile_b, in_dim), lambda i: (i, 0))]
    for w_p, b_p in hidden_padded:
        flat_params += [w_p, b_p]
        # Constant index_map => fetched once, resident in VMEM across the grid.
        in_specs.append(pl.BlockSpec(w_p.shape, lambda i: (0, 0)))
        in_specs.append(pl.BlockSpec(b_p.shape, lambda i: (0, 0)))
    flat_params += [w_out_row, b_out]
    in_specs.append(pl.BlockSpec(w_out_row.shape, lambda i: (0, 0)))
    in_specs.append(pl.BlockSpec(b_out.shape, lambda i: (0, 0)))

    kernel = functools.partial(_fused_mlp_kernel, num_hidden=len(hidden_padded))
    out = pl.pallas_call(
        kernel,
        # Lane-dense output: one (1, tile_b) row per grid step.
        out_shape=jax.ShapeDtypeStruct((num_tiles, 1, tile_b), jnp.float32),
        grid=(num_tiles,),
        in_specs=in_specs,
        out_specs=pl.BlockSpec((1, 1, tile_b), lambda i: (i, 0, 0)),
        compiler_params=pltpu.CompilerParams(
            dimension_semantics=("parallel",),
            vmem_limit_bytes=32 * 1024 * 1024,
        ),
    )(x, *flat_params)
    # (num_tiles, 1, tile_b) is row-major in batch order -> flatten and slice.
    return out.reshape(-1)[:B].reshape(B, 1)


def mlp_reference(x, params):
    *hidden, (w_out, b_out) = params
    for w_t, b in hidden:
        x = jnp.maximum(x @ w_t + b, 0.0)
    return jax.nn.sigmoid(x @ w_out + b_out)


if __name__ == "__main__":
    config = {"layers": [32, 64, 32, 16]}
    batch = 8

    key = jax.random.PRNGKey(0)
    key_x, key_p = jax.random.split(key)
    x = jax.random.normal(key_x, (batch, config["layers"][0]), jnp.float32)
    params = init_mlp_params(key_p, config["layers"])
    prepared = prepare_params(params)

    fwd = jax.jit(mlp_forward)
    out = jax.block_until_ready(fwd(x, prepared))

    ref = mlp_reference(x, params)
    assert out.shape == (batch, 1), out.shape
    assert jnp.allclose(out, ref, atol=1e-5, rtol=1e-5), "mismatch vs reference"

    print("KERNEL_OK")
</pallas_src>

<mosaic_0001>
module attributes {stable_mosaic.version = 11 : i64} {
  func.func @_fused_mlp_kernel(%arg0: i32, %arg1: memref<8x32xf32, #tpu.memory_space<vmem>>, %arg2: memref<32x128xf32, #tpu.memory_space<vmem>>, %arg3: memref<1x128xf32, #tpu.memory_space<vmem>>, %arg4: memref<128x128xf32, #tpu.memory_space<vmem>>, %arg5: memref<1x128xf32, #tpu.memory_space<vmem>>, %arg6: memref<128x128xf32, #tpu.memory_space<vmem>>, %arg7: memref<1x128xf32, #tpu.memory_space<vmem>>, %arg8: memref<1x128xf32, #tpu.memory_space<vmem>>, %arg9: memref<1x1xf32, #tpu.memory_space<vmem>>, %arg10: memref<1x1x8xf32, #tpu.memory_space<vmem>>) attributes {dimension_semantics = [#tpu.dimension_semantics<parallel>], iteration_bounds = array<i64: 1>, scalar_prefetch = 0 : i64, scratch_operands = 0 : i64, tpu.core_type = #tpu.core_type<tc>, window_params = [{transform_indices = @transform_0, window_bounds = array<i64: 8, 32>}, {pipeline_mode = #tpu.pipeline_mode<synchronous>, transform_indices = @transform_1, window_bounds = array<i64: 32, 128>}, {pipeline_mode = #tpu.pipeline_mode<synchronous>, transform_indices = @transform_2, window_bounds = array<i64: 1, 128>}, {pipeline_mode = #tpu.pipeline_mode<synchronous>, transform_indices = @transform_3, window_bounds = array<i64: 128, 128>}, {pipeline_mode = #tpu.pipeline_mode<synchronous>, transform_indices = @transform_4, window_bounds = array<i64: 1, 128>}, {pipeline_mode = #tpu.pipeline_mode<synchronous>, transform_indices = @transform_5, window_bounds = array<i64: 128, 128>}, {pipeline_mode = #tpu.pipeline_mode<synchronous>, transform_indices = @transform_6, window_bounds = array<i64: 1, 128>}, {pipeline_mode = #tpu.pipeline_mode<synchronous>, transform_indices = @transform_7, window_bounds = array<i64: 1, 128>}, {pipeline_mode = #tpu.pipeline_mode<synchronous>, transform_indices = @transform_8, window_bounds = array<i64: 1, 1>}, {transform_indices = @transform_9, window_bounds = array<i64: 1, 1, 8>}]} {
    %c0 = arith.constant 0 : index
    %c0_0 = arith.constant 0 : index
    %0 = vector.load %arg1[%c0, %c0_0] : memref<8x32xf32, #tpu.memory_space<vmem>>, vector<8x32xf32>
    %c0_1 = arith.constant 0 : index
    %c0_2 = arith.constant 0 : index
    %1 = vector.load %arg2[%c0_1, %c0_2] : memref<32x128xf32, #tpu.memory_space<vmem>>, vector<32x128xf32>
    %c0_3 = arith.constant 0 : index
    %c0_4 = arith.constant 0 : index
    %2 = vector.load %arg3[%c0_3, %c0_4] : memref<1x128xf32, #tpu.memory_space<vmem>>, vector<1x128xf32>
    %cst = arith.constant dense<0.000000e+00> : vector<8x128xf32>
    %3 = tpu.matmul %0, %1, %cst {dimension_numbers = #tpu.dot_dimension_numbers<[1], [0], [0], [1], [0, 0, 1, 1], [], []>} : vector<8x32xf32>, vector<32x128xf32>, vector<8x128xf32> -> vector<8x128xf32>
    %4 = vector.broadcast %2 : vector<1x128xf32> to vector<8x128xf32>
    %5 = arith.addf %3, %4 : vector<8x128xf32>
    %cst_5 = arith.constant 0.000000e+00 : f32
    %6 = vector.broadcast %cst_5 : f32 to vector<8x128xf32>
    %7 = arith.maximumf %5, %6 : vector<8x128xf32>
    %c0_6 = arith.constant 0 : index
    %c0_7 = arith.constant 0 : index
    %8 = vector.load %arg4[%c0_6, %c0_7] : memref<128x128xf32, #tpu.memory_space<vmem>>, vector<128x128xf32>
    %c0_8 = arith.constant 0 : index
    %c0_9 = arith.constant 0 : index
    %9 = vector.load %arg5[%c0_8, %c0_9] : memref<1x128xf32, #tpu.memory_space<vmem>>, vector<1x128xf32>
    %cst_10 = arith.constant dense<0.000000e+00> : vector<8x128xf32>
    %10 = tpu.matmul %7, %8, %cst_10 {dimension_numbers = #tpu.dot_dimension_numbers<[1], [0], [0], [1], [0, 0, 1, 1], [], []>} : vector<8x128xf32>, vector<128x128xf32>, vector<8x128xf32> -> vector<8x128xf32>
    %11 = vector.broadcast %9 : vector<1x128xf32> to vector<8x128xf32>
    %12 = arith.addf %10, %11 : vector<8x128xf32>
    %cst_11 = arith.constant 0.000000e+00 : f32
    %13 = vector.broadcast %cst_11 : f32 to vector<8x128xf32>
    %14 = arith.maximumf %12, %13 : vector<8x128xf32>
    %c0_12 = arith.constant 0 : index
    %c0_13 = arith.constant 0 : index
    %15 = vector.load %arg6[%c0_12, %c0_13] : memref<128x128xf32, #tpu.memory_space<vmem>>, vector<128x128xf32>
    %c0_14 = arith.constant 0 : index
    %c0_15 = arith.constant 0 : index
    %16 = vector.load %arg7[%c0_14, %c0_15] : memref<1x128xf32, #tpu.memory_space<vmem>>, vector<1x128xf32>
    %cst_16 = arith.constant dense<0.000000e+00> : vector<8x128xf32>
    %17 = tpu.matmul %14, %15, %cst_16 {dimension_numbers = #tpu.dot_dimension_numbers<[1], [0], [0], [1], [0, 0, 1, 1], [], []>} : vector<8x128xf32>, vector<128x128xf32>, vector<8x128xf32> -> vector<8x128xf32>
    %18 = vector.broadcast %16 : vector<1x128xf32> to vector<8x128xf32>
    %19 = arith.addf %17, %18 : vector<8x128xf32>
    %cst_17 = arith.constant 0.000000e+00 : f32
    %20 = vector.broadcast %cst_17 : f32 to vector<8x128xf32>
    %21 = arith.maximumf %19, %20 : vector<8x128xf32>
    %c0_18 = arith.constant 0 : index
    %c0_19 = arith.constant 0 : index
    %22 = vector.load %arg8[%c0_18, %c0_19] : memref<1x128xf32, #tpu.memory_space<vmem>>, vector<1x128xf32>
    %cst_20 = arith.constant dense<0.000000e+00> : vector<1x8xf32>
    %23 = tpu.matmul %22, %21, %cst_20 {dimension_numbers = #tpu.dot_dimension_numbers<[1], [1], [0], [0], [0, 0, 1, 0], [], []>} : vector<1x128xf32>, vector<8x128xf32>, vector<1x8xf32> -> vector<1x8xf32>
    %c0_21 = arith.constant 0 : index
    %c0_22 = arith.constant 0 : index
    %24 = vector.load %arg9[%c0_21, %c0_22] : memref<1x1xf32, #tpu.memory_space<vmem>>, vector<1x1xf32>
    %25 = vector.broadcast %24 : vector<1x1xf32> to vector<1x8xf32>
    %26 = arith.addf %23, %25 : vector<1x8xf32>
    %27 = arith.negf %26 : vector<1x8xf32>
    %28 = math.exp %27 : vector<1x8xf32>
    %cst_23 = arith.constant 1.000000e+00 : f32
    %29 = vector.broadcast %cst_23 : f32 to vector<1x8xf32>
    %30 = arith.addf %29, %28 : vector<1x8xf32>
    %31 = arith.divf %29, %30 : vector<1x8xf32>
    %32 = vector.shape_cast %31 : vector<1x8xf32> to vector<1x1x8xf32>
    %c0_24 = arith.constant 0 : index
    %c0_25 = arith.constant 0 : index
    %c0_26 = arith.constant 0 : index
    %33 = vector.load %arg10[%c0_24, %c0_25, %c0_26] : memref<1x1x8xf32, #tpu.memory_space<vmem>>, vector<1x1x8xf32>
    tpu.vector_store %arg10[%c0_24, %c0_25, %c0_26], %32 {strides = array<i32>} : memref<1x1x8xf32, #tpu.memory_space<vmem>>, vector<1x1x8xf32>,
    return
  }
  func.func @transform_0(%arg0: i32) -> (i32, i32) {
    %c0_i32 = arith.constant 0 : i32
    %c0_i32_0 = arith.constant 0 : i32
    return %arg0, %c0_i32 : i32, i32
  }
  func.func @transform_1(%arg0: i32) -> (i32, i32) {
    %c0_i32 = arith.constant 0 : i32
    %c0_i32_0 = arith.constant 0 : i32
    %c0_i32_1 = arith.constant 0 : i32
    return %c0_i32, %c0_i32_0 : i32, i32
  }
  func.func @transform_2(%arg0: i32) -> (i32, i32) {
    %c0_i32 = arith.constant 0 : i32
    %c0_i32_0 = arith.constant 0 : i32
    %c0_i32_1 = arith.constant 0 : i32
    return %c0_i32, %c0_i32_0 : i32, i32
  }
  func.func @transform_3(%arg0: i32) -> (i32, i32) {
    %c0_i32 = arith.constant 0 : i32
    %c0_i32_0 = arith.constant 0 : i32
    %c0_i32_1 = arith.constant 0 : i32
    return %c0_i32, %c0_i32_0 : i32, i32
  }
  func.func @transform_4(%arg0: i32) -> (i32, i32) {
    %c0_i32 = arith.constant 0 : i32
    %c0_i32_0 = arith.constant 0 : i32
    %c0_i32_1 = arith.constant 0 : i32
    return %c0_i32, %c0_i32_0 : i32, i32
  }
  func.func @transform_5(%arg0: i32) -> (i32, i32) {
    %c0_i32 = arith.constant 0 : i32
    %c0_i32_0 = arith.constant 0 : i32
    %c0_i32_1 = arith.constant 0 : i32
    return %c0_i32, %c0_i32_0 : i32, i32
  }
  func.func @transform_6(%arg0: i32) -> (i32, i32) {
    %c0_i32 = arith.constant 0 : i32
    %c0_i32_0 = arith.constant 0 : i32
    %c0_i32_1 = arith.constant 0 : i32
    return %c0_i32, %c0_i32_0 : i32, i32
  }
  func.func @transform_7(%arg0: i32) -> (i32, i32) {
    %c0_i32 = arith.constant 0 : i32
    %c0_i32_0 = arith.constant 0 : i32
    %c0_i32_1 = arith.constant 0 : i32
    return %c0_i32, %c0_i32_0 : i32, i32
  }
  func.func @transform_8(%arg0: i32) -> (i32, i32) {
    %c0_i32 = arith.constant 0 : i32
    %c0_i32_0 = arith.constant 0 : i32
    %c0_i32_1 = arith.constant 0 : i32
    return %c0_i32, %c0_i32_0 : i32, i32
  }
  func.func @transform_9(%arg0: i32) -> (i32, i32, i32) {
    %c0_i32 = arith.constant 0 : i32
    %c0_i32_0 = arith.constant 0 : i32
    %c0_i32_1 = arith.constant 0 : i32
    return %arg0, %c0_i32, %c0_i32_0 : i32, i32, i32
  }
}

</mosaic_0001>

<llo_original>
// kernel: mlp_forward.1
$region0: #{mlp_forward.1}
  #allocation0 [shape = 'u32[]', space=smem, size = 0x4, offset = 0x4, fixed_abs, tag = 'smem constant byte address 0x4 - core index']
  #allocation1 [shape = 'u32[144,128]{1,0:T(1,128)}', space=vmem, size = 0x12000, scoped, tag = 'internal scratch']
  #allocation2 [shape = 'f32[1,1]{1,0:T(1,128)S(1)}', space=vmem, size = 0x200, scoped, tag = 'scoped memory for mlp_forward.1']
  %s0 = inlined_call_operand.hbm [shape: f32[8,32], index: 0, kind: input, shape index: {}]
  %s1 = inlined_call_operand.hbm [shape: f32[32,128], index: 1, kind: input, shape index: {}]
  %s2 = inlined_call_operand.vmem [shape: f32[1,128], index: 2, kind: input, shape index: {}]
  %s3 = inlined_call_operand.hbm [shape: f32[128,128], index: 3, kind: input, shape index: {}]
  %s4 = inlined_call_operand.vmem [shape: f32[1,128], index: 4, kind: input, shape index: {}]
  %s5 = inlined_call_operand.hbm [shape: f32[128,128], index: 5, kind: input, shape index: {}]
  %s6 = inlined_call_operand.vmem [shape: f32[1,128], index: 6, kind: input, shape index: {}]
  %s7 = inlined_call_operand.vmem [shape: f32[1,128], index: 7, kind: input, shape index: {}]
  %s8 = inlined_call_operand.<no memory space> [shape: f32[1,1], index: 8, kind: input, shape index: {}]
  %s9 = inlined_call_operand.hbm [shape: f32[1,1,8], index: 9, kind: output, shape index: {}]
  %s10 = sld [smem:[#allocation0]]
  $region62: #{mlp_forward.1} parent=0
    _
  %s12 = ssub.s32 1, %s10
  %s13 = scalar_select 0, %s12, %s10
  %v14 = vstv %s8
  %15 = vst [vmem:[#allocation2] sm:$0x1] %v14
  $region1: #{mlp_forward.1} parent=0
    #allocation3 [shape = 'u8[4096]{0}', space=vmem, size = 0x1000, scoped, tag = 'input window, operand 0, single buffered']
    #allocation4 [shape = 's32[1]{0}', space=sflag, size = 0x4, scoped, tag = 'scoped memory for mlp_forward.1']
    #allocation5 [shape = 's32[1]{0}', space=sflag, size = 0x4, scoped, tag = 'scoped memory for mlp_forward.1']
    #allocation6 [shape = 'u8[16384]{0}', space=vmem, size = 0x4000, scoped, tag = 'input window, operand 1, single buffered']
    #allocation7 [shape = 's32[1]{0}', space=sflag, size = 0x4, scoped, tag = 'scoped memory for mlp_forward.1']
    #allocation8 [shape = 'u8[65536]{0}', space=vmem, size = 0x10000, scoped, tag = 'input window, operand 3, single buffered']
    #allocation9 [shape = 'u8[65536]{0}', space=vmem, size = 0x10000, scoped, tag = 'input window, operand 5, single buffered']
    #allocation10 [shape = 's32[1]{0}', space=sflag, size = 0x4, scoped, tag = 'scoped memory for mlp_forward.1']
    #allocation11 [shape = 'u8[512]{0}', space=vmem, size = 0x400, scoped, tag = 'output window, operand 0, single buffered']
    %16 = vsyncpa [#allocation4], 0
    %17 = vsyncpa [#allocation7], 0
    %18 = vsyncpa [#allocation10], 0
    %19 = vsyncpa [#allocation5], 0
    // Predicated region
    $region2: #{mlp_forward.1} parent=1 // pred_check
      _
    $region3: #{mlp_forward.1} parent=1 // pred_check_branch
      %21 = sbr.rel (0) target = $region5
    $region4: #{mlp_forward.1} parent=1 // pred_region
      %s23 = ssub.s32 128, 128
      %24 = vsyncadd [#allocation4], %s23
      %s26 = sshll.u32 [#allocation3], 4
      %s27 = int_to_ptr.vmem [resolvable:$true] %s26
      %29 = dma.hbm_to_vmem [thread:$0]  %s0, 128, %s27, [#allocation4]
    $region5: #{mlp_forward.1} parent=1 // pred_fallthru
      _
    // Predicated region
    $region6: #{mlp_forward.1} parent=1 // pred_check
      _
    $region7: #{mlp_forward.1} parent=1 // pred_check_branch
      %31 = sbr.rel (0) target = $region9
    $region8: #{mlp_forward.1} parent=1 // pred_region
      %s33 = ssub.s32 512, 512
      %34 = vsyncadd [#allocation7], %s33
      %s35 = sshll.u32 [#allocation6], 4
      %s36 = int_to_ptr.vmem [resolvable:$true] %s35
      %41 = dma.hbm_to_vmem [thread:$0]  %s1, 512, %s36, [#allocation7], 128, 128, 8
    $region9: #{mlp_forward.1} parent=1 // pred_fallthru
      _
    // Predicated region
    $region10: #{mlp_forward.1} parent=1 // pred_check
      _
    $region11: #{mlp_forward.1} parent=1 // pred_check_branch
      %43 = sbr.rel (0) target = $region13
    $region12: #{mlp_forward.1} parent=1 // pred_region
      _
    $region13: #{mlp_forward.1} parent=1 // pred_fallthru
      _
    // Predicated region
    $region14: #{mlp_forward.1} parent=1 // pred_check
      _
    $region15: #{mlp_forward.1} parent=1 // pred_check_branch
      %45 = sbr.rel (0) target = $region17
    $region16: #{mlp_forward.1} parent=1 // pred_region
      %s47 = ssub.s32 2048, 2048
      %48 = vsyncadd [#allocation7], %s47
      %s49 = sshll.u32 [#allocation8], 4
      %s50 = int_to_ptr.vmem [resolvable:$true] %s49
      %55 = dma.hbm_to_vmem [thread:$0]  %s3, 2048, %s50, [#allocation7], 128, 128, 8
    $region17: #{mlp_forward.1} parent=1 // pred_fallthru
      _
    // Predicated region
    $region18: #{mlp_forward.1} parent=1 // pred_check
      _
    $region19: #{mlp_forward.1} parent=1 // pred_check_branch
      %57 = sbr.rel (0) target = $region21
    $region20: #{mlp_forward.1} parent=1 // pred_region
      _
    $region21: #{mlp_forward.1} parent=1 // pred_fallthru
      _
    // Predicated region
    $region22: #{mlp_forward.1} parent=1 // pred_check
      _
    $region23: #{mlp_forward.1} parent=1 // pred_check_branch
      %59 = sbr.rel (0) target = $region25
    $region24: #{mlp_forward.1} parent=1 // pred_region
      %s61 = ssub.s32 2048, 2048
      %62 = vsyncadd [#allocation10], %s61
      %s63 = sshll.u32 [#allocation9], 4
      %s64 = int_to_ptr.vmem [resolvable:$true] %s63
      %69 = dma.hbm_to_vmem [thread:$0]  %s5, 2048, %s64, [#allocation10], 128, 128, 8
    $region25: #{mlp_forward.1} parent=1 // pred_fallthru
      _
    // Predicated region
    $region26: #{mlp_forward.1} parent=1 // pred_check
      _
    $region27: #{mlp_forward.1} parent=1 // pred_check_branch
      %71 = sbr.rel (0) target = $region29
    $region28: #{mlp_forward.1} parent=1 // pred_region
      _
    $region29: #{mlp_forward.1} parent=1 // pred_fallthru
      _
    // Predicated region
    $region30: #{mlp_forward.1} parent=1 // pred_check
      _
    $region31: #{mlp_forward.1} parent=1 // pred_check_branch
      %73 = sbr.rel (0) target = $region33
    $region32: #{mlp_forward.1} parent=1 // pred_region
      _
    $region33: #{mlp_forward.1} parent=1 // pred_fallthru
      _
    // Predicated region
    $region34: #{mlp_forward.1} parent=1 // pred_check
      _
    $region35: #{mlp_forward.1} parent=1 // pred_check_branch
      %75 = sbr.rel (0) target = $region37
    $region36: #{mlp_forward.1} parent=1 // pred_region
      _
    $region37: #{mlp_forward.1} parent=1 // pred_fallthru
      _
    // Predicated region
    $region38: #{mlp_forward.1} parent=1 // pred_check
      _
    $region39: #{mlp_forward.1} parent=1 // pred_check_branch
      %77 = sbr.rel (0) target = $region41
    $region40: #{mlp_forward.1} parent=1 // pred_region
      %78 = dma.done [#allocation4], 128
    $region41: #{mlp_forward.1} parent=1 // pred_fallthru
      _
    // Predicated region
    $region42: #{mlp_forward.1} parent=1 // pred_check
      _
    $region43: #{mlp_forward.1} parent=1 // pred_check_branch
      %80 = sbr.rel (0) target = $region45
    $region44: #{mlp_forward.1} parent=1 // pred_region
      %81 = dma.done [#allocation7], 512
    $region45: #{mlp_forward.1} parent=1 // pred_fallthru
      _
    // Predicated region
    $region46: #{mlp_forward.1} parent=1 // pred_check
      _
    $region47: #{mlp_forward.1} parent=1 // pred_check_branch
      %83 = sbr.rel (0) target = $region49
    $region48: #{mlp_forward.1} parent=1 // pred_region
      %84 = dma.done [#allocation7], 2048
    $region49: #{mlp_forward.1} parent=1 // pred_fallthru
      _
    // Predicated region
    $region50: #{mlp_forward.1} parent=1 // pred_check
      _
    $region51: #{mlp_forward.1} parent=1 // pred_check_branch
      %86 = sbr.rel (0) target = $region53
    $region52: #{mlp_forward.1} parent=1 // pred_region
      %87 = dma.done [#allocation10], 2048
    $region53: #{mlp_forward.1} parent=1 // pred_fallthru
      _
    %v88 = vld [vmem:[#allocation3] sm:$0xff]
    %v89 = vld [vmem:[#allocation6] sm:$0xff]
    %v90 = vld [vmem:[#allocation6 + $0x8] sm:$0xff]
    %v91 = vld [vmem:[#allocation6 + $0x10] sm:$0xff]
    %v92 = vld [vmem:[#allocation6 + $0x18] sm:$0xff]
    %v93 = vld [vmem:[%s2] sm:$0x1]
    %v95 = vlaneseq
    %v96 = vshrl.u32 %v95, 7
    %v97 = vsub.s32 0, %v96
    %v98 = vrot.slane %v93, %v97
    %vm100 = vcmask 261120
    %v102 = vsel %vm100, %v88, 0
    %104 = vmatprep.subr.mxu0 0.0
    %105 = vmatpush1.msra.mxu0 0.0
    %106 = vmatprep.subr.mxu0 0.0
    %107 = vmatpush1.msra.mxu0 0.0
    %108 = vmatprep.subr.mxu0 0.0
    %109 = vmatpush1.msra.mxu0 0.0
    %110 = vmatprep.subr.mxu0 0.0
    %111 = vmatpush1.msra.mxu0 0.0
    %112 = vmatprep.subr.mxu0 0.0
    %113 = vmatpush1.msra.mxu0 0.0
    %114 = vmatprep.subr.mxu0 0.0
    %115 = vmatpush1.msra.mxu0 0.0
    %116 = vmatprep.subr.mxu0 0.0
    %117 = vmatpush1.msra.mxu0 0.0
    %118 = vmatprep.subr.mxu0 0.0
    %119 = vmatpush1.msra.mxu0 0.0
    %120 = vmatprep.subr.mxu0 0.0
    %121 = vmatpush1.msra.mxu0 0.0
    %122 = vmatprep.subr.mxu0 0.0
    %123 = vmatpush1.msra.mxu0 0.0
    %124 = vmatprep.subr.mxu0 0.0
    %125 = vmatpush1.msra.mxu0 0.0
    %126 = vmatprep.subr.mxu0 0.0
    %127 = vmatpush1.msra.mxu0 0.0
    %128 = vmatprep.subr.mxu0 0.0
    %129 = vmatpush1.msra.mxu0 %v92
    %130 = vmatprep.subr.mxu0 0.0
    %131 = vmatpush1.msra.mxu0 %v91
    %132 = vmatprep.subr.mxu0 0.0
    %133 = vmatpush1.msra.mxu0 %v90
    %134 = vmatprep.subr.mxu0 0.0
    %135 = vmatpush1.msra.mxu0 %v89
    %136 = vmatprep.subr.mxu0 0.0
    %137 = vmatpush2.msra.mxu0 0.0
    %138 = vmatprep.subr.mxu0 0.0
    %139 = vmatpush2.msra.mxu0 0.0
    %140 = vmatprep.subr.mxu0 0.0
    %141 = vmatpush2.msra.mxu0 0.0
    %142 = vmatprep.subr.mxu0 0.0
    %143 = vmatpush2.msra.mxu0 0.0
    %144 = vmatprep.subr.mxu0 0.0
    %145 = vmatpush2.msra.mxu0 0.0
    %146 = vmatprep.subr.mxu0 0.0
    %147 = vmatpush2.msra.mxu0 0.0
    %148 = vmatprep.subr.mxu0 0.0
    %149 = vmatpush2.msra.mxu0 0.0
    %150 = vmatprep.subr.mxu0 0.0
    %151 = vmatpush2.msra.mxu0 0.0
    %152 = vmatprep.subr.mxu0 0.0
    %153 = vmatpush2.msra.mxu0 0.0
    %154 = vmatprep.subr.mxu0 0.0
    %155 = vmatpush2.msra.mxu0 0.0
    %156 = vmatprep.subr.mxu0 0.0
    %157 = vmatpush2.msra.mxu0 0.0
    %158 = vmatprep.subr.mxu0 0.0
    %159 = vmatpush2.msra.mxu0 0.0
    %160 = vmatprep.subr.mxu0 0.0
    %161 = vmatpush2.msra.mxu0 0.0
    %162 = vmatprep.subr.mxu0 0.0
    %163 = vmatpush2.msra.mxu0 0.0
    %164 = vmatprep.subr.mxu0 0.0
    %165 = vmatpush2.msra.mxu0 0.0
    %166 = vmatprep.subr.mxu0 0.0
    %167 = vmatpush2.msra.mxu0 0.0
    %168 = vmatprep.mubr.f32.mxu0 0.0
    %169 = vmatmul.mubr.f32.gmra.mxu0 %v102
    %v170 = vpop.f32.mrf.mxu0
    %v171 = vadd.f32 %v98, %v170
    %v172 = vpop.f32.mrf.mxu0
    %173 = vdwg.mxu0
    %v174 = vmax.f32 %v171, 0.0
    %v175 = vld [vmem:[#allocation8] sm:$0xff]
    %v176 = vld [vmem:[#allocation8 + $0x8] sm:$0xff]
    %v177 = vld [vmem:[#allocation8 + $0x10] sm:$0xff]
    %v178 = vld [vmem:[#allocation8 + $0x18] sm:$0xff]
    %v179 = vld [vmem:[#allocation8 + $0x20] sm:$0xff]
    %v180 = vld [vmem:[#allocation8 + $0x28] sm:$0xff]
    %v181 = vld [vmem:[#allocation8 + $0x30] sm:$0xff]
    %v182 = vld [vmem:[#allocation8 + $0x38] sm:$0xff]
    %v183 = vld [vmem:[#allocation8 + $0x40] sm:$0xff]
    %v184 = vld [vmem:[#allocation8 + $0x48] sm:$0xff]
    %v185 = vld [vmem:[#allocation8 + $0x50] sm:$0xff]
    %v186 = vld [vmem:[#allocation8 + $0x58] sm:$0xff]
    %v187 = vld [vmem:[#allocation8 + $0x60] sm:$0xff]
    %v188 = vld [vmem:[#allocation8 + $0x68] sm:$0xff]
    %v189 = vld [vmem:[#allocation8 + $0x70] sm:$0xff]
    %v190 = vld [vmem:[#allocation8 + $0x78] sm:$0xff]
    %v191 = vld [vmem:[%s4] sm:$0x1]
    %v193 = vlaneseq
    %v194 = vshrl.u32 %v193, 7
    %v195 = vsub.s32 0, %v194
    %v196 = vrot.slane %v191, %v195
    %198 = vmatprep.subr.mxu0 0.0
    %199 = vmatpush1.msra.mxu0 %v190
    %200 = vmatprep.subr.mxu0 0.0
    %201 = vmatpush1.msra.mxu0 %v189
    %202 = vmatprep.subr.mxu0 0.0
    %203 = vmatpush1.msra.mxu0 %v188
    %204 = vmatprep.subr.mxu0 0.0
    %205 = vmatpush1.msra.mxu0 %v187
    %206 = vmatprep.subr.mxu0 0.0
    %207 = vmatpush1.msra.mxu0 %v186
    %208 = vmatprep.subr.mxu0 0.0
    %209 = vmatpush1.msra.mxu0 %v185
    %210 = vmatprep.subr.mxu0 0.0
    %211 = vmatpush1.msra.mxu0 %v184
    %212 = vmatprep.subr.mxu0 0.0
    %213 = vmatpush1.msra.mxu0 %v183
    %214 = vmatprep.subr.mxu0 0.0
    %215 = vmatpush1.msra.mxu0 %v182
    %216 = vmatprep.subr.mxu0 0.0
    %217 = vmatpush1.msra.mxu0 %v181
    %218 = vmatprep.subr.mxu0 0.0
    %219 = vmatpush1.msra.mxu0 %v180
    %220 = vmatprep.subr.mxu0 0.0
    %221 = vmatpush1.msra.mxu0 %v179
    %222 = vmatprep.subr.mxu0 0.0
    %223 = vmatpush1.msra.mxu0 %v178
    %224 = vmatprep.subr.mxu0 0.0
    %225 = vmatpush1.msra.mxu0 %v177
    %226 = vmatprep.subr.mxu0 0.0
    %227 = vmatpush1.msra.mxu0 %v176
    %228 = vmatprep.subr.mxu0 0.0
    %229 = vmatpush1.msra.mxu0 %v175
    %230 = vmatprep.subr.mxu0 0.0
    %231 = vmatpush2.msra.mxu0 0.0
    %232 = vmatprep.subr.mxu0 0.0
    %233 = vmatpush2.msra.mxu0 0.0
    %234 = vmatprep.subr.mxu0 0.0
    %235 = vmatpush2.msra.mxu0 0.0
    %236 = vmatprep.subr.mxu0 0.0
    %237 = vmatpush2.msra.mxu0 0.0
    %238 = vmatprep.subr.mxu0 0.0
    %239 = vmatpush2.msra.mxu0 0.0
    %240 = vmatprep.subr.mxu0 0.0
    %241 = vmatpush2.msra.mxu0 0.0
    %242 = vmatprep.subr.mxu0 0.0
    %243 = vmatpush2.msra.mxu0 0.0
    %244 = vmatprep.subr.mxu0 0.0
    %245 = vmatpush2.msra.mxu0 0.0
    %246 = vmatprep.subr.mxu0 0.0
    %247 = vmatpush2.msra.mxu0 0.0
    %248 = vmatprep.subr.mxu0 0.0
    %249 = vmatpush2.msra.mxu0 0.0
    %250 = vmatprep.subr.mxu0 0.0
    %251 = vmatpush2.msra.mxu0 0.0
    %252 = vmatprep.subr.mxu0 0.0
    %253 = vmatpush2.msra.mxu0 0.0
    %254 = vmatprep.subr.mxu0 0.0
    %255 = vmatpush2.msra.mxu0 0.0
    %256 = vmatprep.subr.mxu0 0.0
    %257 = vmatpush2.msra.mxu0 0.0
    %258 = vmatprep.subr.mxu0 0.0
    %259 = vmatpush2.msra.mxu0 0.0
    %260 = vmatprep.subr.mxu0 0.0
    %261 = vmatpush2.msra.mxu0 0.0
    %262 = vmatprep.mubr.f32.mxu0 0.0
    %263 = vmatmul.mubr.f32.gmra.mxu0 %v174
    %v264 = vpop.f32.mrf.mxu0
    %v265 = vadd.f32 %v196, %v264
    %v266 = vpop.f32.mrf.mxu0
    %267 = vdwg.mxu0
    %v268 = vmax.f32 %v265, 0.0
    %v269 = vld [vmem:[#allocation9] sm:$0xff]
    %v270 = vld [vmem:[#allocation9 + $0x8] sm:$0xff]
    %v271 = vld [vmem:[#allocation9 + $0x10] sm:$0xff]
    %v272 = vld [vmem:[#allocation9 + $0x18] sm:$0xff]
    %v273 = vld [vmem:[#allocation9 + $0x20] sm:$0xff]
    %v274 = vld [vmem:[#allocation9 + $0x28] sm:$0xff]
    %v275 = vld [vmem:[#allocation9 + $0x30] sm:$0xff]
    %v276 = vld [vmem:[#allocation9 + $0x38] sm:$0xff]
    %v277 = vld [vmem:[#allocation9 + $0x40] sm:$0xff]
    %v278 = vld [vmem:[#allocation9 + $0x48] sm:$0xff]
    %v279 = vld [vmem:[#allocation9 + $0x50] sm:$0xff]
    %v280 = vld [vmem:[#allocation9 + $0x58] sm:$0xff]
    %v281 = vld [vmem:[#allocation9 + $0x60] sm:$0xff]
    %v282 = vld [vmem:[#allocation9 + $0x68] sm:$0xff]
    %v283 = vld [vmem:[#allocation9 + $0x70] sm:$0xff]
    %v284 = vld [vmem:[#allocation9 + $0x78] sm:$0xff]
    %v285 = vld [vmem:[%s6] sm:$0x1]
    %v287 = vlaneseq
    %v288 = vshrl.u32 %v287, 7
    %v289 = vsub.s32 0, %v288
    %v290 = vrot.slane %v285, %v289
    %292 = vmatprep.subr.mxu0 0.0
    %293 = vmatpush1.msra.mxu0 %v284
    %294 = vmatprep.subr.mxu0 0.0
    %295 = vmatpush1.msra.mxu0 %v283
    %296 = vmatprep.subr.mxu0 0.0
    %297 = vmatpush1.msra.mxu0 %v282
    %298 = vmatprep.subr.mxu0 0.0
    %299 = vmatpush1.msra.mxu0 %v281
    %300 = vmatprep.subr.mxu0 0.0
    %301 = vmatpush1.msra.mxu0 %v280
    %302 = vmatprep.subr.mxu0 0.0
    %303 = vmatpush1.msra.mxu0 %v279
    %304 = vmatprep.subr.mxu0 0.0
    %305 = vmatpush1.msra.mxu0 %v278
    %306 = vmatprep.subr.mxu0 0.0
    %307 = vmatpush1.msra.mxu0 %v277
    %308 = vmatprep.subr.mxu0 0.0
    %309 = vmatpush1.msra.mxu0 %v276
    %310 = vmatprep.subr.mxu0 0.0
    %311 = vmatpush1.msra.mxu0 %v275
    %312 = vmatprep.subr.mxu0 0.0
    %313 = vmatpush1.msra.mxu0 %v274
    %314 = vmatprep.subr.mxu0 0.0
    %315 = vmatpush1.msra.mxu0 %v273
    %316 = vmatprep.subr.mxu0 0.0
    %317 = vmatpush1.msra.mxu0 %v272
    %318 = vmatprep.subr.mxu0 0.0
    %319 = vmatpush1.msra.mxu0 %v271
    %320 = vmatprep.subr.mxu0 0.0
    %321 = vmatpush1.msra.mxu0 %v270
    %322 = vmatprep.subr.mxu0 0.0
    %323 = vmatpush1.msra.mxu0 %v269
    %324 = vmatprep.subr.mxu0 0.0
    %325 = vmatpush2.msra.mxu0 0.0
    %326 = vmatprep.subr.mxu0 0.0
    %327 = vmatpush2.msra.mxu0 0.0
    %328 = vmatprep.subr.mxu0 0.0
    %329 = vmatpush2.msra.mxu0 0.0
    %330 = vmatprep.subr.mxu0 0.0
    %331 = vmatpush2.msra.mxu0 0.0
    %332 = vmatprep.subr.mxu0 0.0
    %333 = vmatpush2.msra.mxu0 0.0
    %334 = vmatprep.subr.mxu0 0.0
    %335 = vmatpush2.msra.mxu0 0.0
    %336 = vmatprep.subr.mxu0 0.0
    %337 = vmatpush2.msra.mxu0 0.0
    %338 = vmatprep.subr.mxu0 0.0
    %339 = vmatpush2.msra.mxu0 0.0
    %340 = vmatprep.subr.mxu0 0.0
    %341 = vmatpush2.msra.mxu0 0.0
    %342 = vmatprep.subr.mxu0 0.0
    %343 = vmatpush2.msra.mxu0 0.0
    %344 = vmatprep.subr.mxu0 0.0
    %345 = vmatpush2.msra.mxu0 0.0
    %346 = vmatprep.subr.mxu0 0.0
    %347 = vmatpush2.msra.mxu0 0.0
    %348 = vmatprep.subr.mxu0 0.0
    %349 = vmatpush2.msra.mxu0 0.0
    %350 = vmatprep.subr.mxu0 0.0
    %351 = vmatpush2.msra.mxu0 0.0
    %352 = vmatprep.subr.mxu0 0.0
    %353 = vmatpush2.msra.mxu0 0.0
    %354 = vmatprep.subr.mxu0 0.0
    %355 = vmatpush2.msra.mxu0 0.0
    %356 = vmatprep.mubr.f32.mxu0 0.0
    %357 = vmatmul.mubr.f32.gmra.mxu0 %v268
    %v358 = vpop.f32.mrf.mxu0
    %v359 = vadd.f32 %v290, %v358
    %v360 = vpop.f32.mrf.mxu0
    %361 = vdwg.mxu0
    %v362 = vmax.f32 %v359, 0.0
    %v363 = vld [vmem:[%s7] sm:$0x1]
    %v364 = vld [vmem:[#allocation2] sm:$0x1]
    %366 = vset.pattern.permute.xlu0 0
    %367 = vperm.xlu0 %366, %v364
    %v368 = vpop.permute.xlu0 %367
    %v370 = vlaneseq
    %v371 = vshrl.u32 %v370, 7
    %v372 = vsub.s32 0, %v371
    %v373 = vrot.slane %v368, %v372
    %374 = vmatprep.subr.mxu0 0.0
    %375 = vmatpush1.xpose.msra.mxu0 0.0
    %376 = vmatprep.subr.mxu0 0.0
    %377 = vmatpush1.xpose.msra.mxu0 0.0
    %378 = vmatprep.subr.mxu0 0.0
    %379 = vmatpush1.xpose.msra.mxu0 0.0
    %380 = vmatprep.subr.mxu0 0.0
    %381 = vmatpush1.xpose.msra.mxu0 0.0
    %382 = vmatprep.subr.mxu0 0.0
    %383 = vmatpush1.xpose.msra.mxu0 0.0
    %384 = vmatprep.subr.mxu0 0.0
    %385 = vmatpush1.xpose.msra.mxu0 0.0
    %386 = vmatprep.subr.mxu0 0.0
    %387 = vmatpush1.xpose.msra.mxu0 0.0
    %388 = vmatprep.subr.mxu0 0.0
    %389 = vmatpush1.xpose.msra.mxu0 0.0
    %390 = vmatprep.subr.mxu0 0.0
    %391 = vmatpush1.xpose.msra.mxu0 0.0
    %392 = vmatprep.subr.mxu0 0.0
    %393 = vmatpush1.xpose.msra.mxu0 0.0
    %394 = vmatprep.subr.mxu0 0.0
    %395 = vmatpush1.xpose.msra.mxu0 0.0
    %396 = vmatprep.subr.mxu0 0.0
    %397 = vmatpush1.xpose.msra.mxu0 0.0
    %398 = vmatprep.subr.mxu0 0.0
    %399 = vmatpush1.xpose.msra.mxu0 0.0
    %400 = vmatprep.subr.mxu0 0.0
    %401 = vmatpush1.xpose.msra.mxu0 0.0
    %402 = vmatprep.subr.mxu0 0.0
    %403 = vmatpush1.xpose.msra.mxu0 0.0
    %404 = vmatprep.subr.mxu0 0.0
    %405 = vmatpush1.xpose.msra.mxu0 %v362
    %406 = vmatprep.subr.mxu0 0.0
    %407 = vmatpush2.xpose.msra.mxu0 0.0
    %408 = vmatprep.subr.mxu0 0.0
    %409 = vmatpush2.xpose.msra.mxu0 0.0
    %410 = vmatprep.subr.mxu0 0.0
    %411 = vmatpush2.xpose.msra.mxu0 0.0
    %412 = vmatprep.subr.mxu0 0.0
    %413 = vmatpush2.xpose.msra.mxu0 0.0
    %414 = vmatprep.subr.mxu0 0.0
    %415 = vmatpush2.xpose.msra.mxu0 0.0
    %416 = vmatprep.subr.mxu0 0.0
    %417 = vmatpush2.xpose.msra.mxu0 0.0
    %418 = vmatprep.subr.mxu0 0.0
    %419 = vmatpush2.xpose.msra.mxu0 0.0
    %420 = vmatprep.subr.mxu0 0.0
    %421 = vmatpush2.xpose.msra.mxu0 0.0
    %422 = vmatprep.subr.mxu0 0.0
    %423 = vmatpush2.xpose.msra.mxu0 0.0
    %424 = vmatprep.subr.mxu0 0.0
    %425 = vmatpush2.xpose.msra.mxu0 0.0
    %426 = vmatprep.subr.mxu0 0.0
    %427 = vmatpush2.xpose.msra.mxu0 0.0
    %428 = vmatprep.subr.mxu0 0.0
    %429 = vmatpush2.xpose.msra.mxu0 0.0
    %430 = vmatprep.subr.mxu0 0.0
    %431 = vmatpush2.xpose.msra.mxu0 0.0
    %432 = vmatprep.subr.mxu0 0.0
    %433 = vmatpush2.xpose.msra.mxu0 0.0
    %434 = vmatprep.subr.mxu0 0.0
    %435 = vmatpush2.xpose.msra.mxu0 0.0
    %436 = vmatprep.subr.mxu0 0.0
    %437 = vmatpush2.xpose.msra.mxu0 0.0
    %438 = vmatprep.mubr.f32.mxu0 0.0
    %439 = vmatmul.mubr.f32.gmra.mxu0 %v363
    %v440 = vpop.f32.mrf.mxu0
    %v441 = vadd.f32 %v373, %v440
    %v442 = vpop.f32.mrf.mxu0
    %443 = vdwg.mxu0
    %v444 = vxor.u32 %v441, 2147483648
    %v445 = vmul.f32 %v444, 1.442695
    %v446 = vpow.pop %v445
    %v447 = vadd.f32 %v446, 1.0
    %v448 = vrcp.pop %v447
    %v449 = vmul.f32 1.0, %v448
    %vm450 = vcmask 57344
    %451 = vst.msk [vmem:[#allocation11] sm:$0x1] %vm450, %v449
    // Predicated region
    $region54: #{mlp_forward.1} parent=1 // pred_check
      _
    $region55: #{mlp_forward.1} parent=1 // pred_check_branch
      %453 = sbr.rel (0) target = $region57
    $region56: #{mlp_forward.1} parent=1 // pred_region
      %s455 = ssub.s32 16, 16
      %456 = vsyncadd [#allocation5], %s455
      %s458 = sshll.u32 [#allocation11], 4
      %s459 = int_to_ptr.vmem [resolvable:$true] %s458
      %461 = dma.vmem_to_hbm [thread:$0]  %s459, 16, %s9, [#allocation5]
    $region57: #{mlp_forward.1} parent=1 // pred_fallthru
      _
    // Predicated region
    $region58: #{mlp_forward.1} parent=1 // pred_check
      _
    $region59: #{mlp_forward.1} parent=1 // pred_check_branch
      %463 = sbr.rel (0) target = $region61
    $region60: #{mlp_forward.1} parent=1 // pred_region
      %464 = dma.done [#allocation5], 16
    $region61: #{mlp_forward.1} parent=1 // pred_fallthru
      _
    %465 = vsyncpa [#allocation4], 1
    %466 = vsyncpa [#allocation7], 1
    %467 = vsyncpa [#allocation10], 1
    %468 = vsyncpa [#allocation5], 1

</llo_original>
